<compile_context>
chip_gen: v7x
topology: tpu7x:2x2x1
jax: 0.10.0
libtpu: 0.0.40
codegen_flags: <defaults>
</compile_context>

<pallas_src>
import functools

import jax
import jax.numpy as jnp
from jax.experimental import pallas as pl
from jax.experimental.pallas import tpu as pltpu


def _round_up(x: int, m: int) -> int:
    return (x + m - 1) // m * m


def _patch_embed_kernel(x_ref, w_ref, b_ref, o_ref):
    # x_ref: (tm, K) bf16   w_ref: (K, Np) bf16   b_ref: (1, Np) f32   o_ref: (tm, Np)
    acc = jnp.dot(x_ref[...], w_ref[...], preferred_element_type=jnp.float32)
    o_ref[...] = (acc + b_ref[...]).astype(o_ref.dtype)


def patch_embed_matmul(patches, weight, bias, *, tm=1024, out_dtype=None,
                       compute_dtype=jnp.bfloat16,
                       vmem_limit_bytes=32 * 1024 * 1024):
    """out[M, N] = patches[M, K] @ weight[K, N] + bias[N], tiled along M."""
    M, K = patches.shape
    Kw, N = weight.shape
    assert K == Kw
    if out_dtype is None:
        out_dtype = patches.dtype

    # Lane-dense output: pad embed_dim up to a multiple of 128 (unmasked vst).
    Np = _round_up(N, 128)

    # Explicit M tile (multiple of 8).  Per grid step (double-buffered):
    #   patches: 2 * tm * 128 * 2B (bf16, K lane-padded to 128)
    #   output : 2 * tm * 128 * 4B
    # => ~1.5 MiB at tm=1024, comfortably inside v7x's 64 MiB (32 MiB scoped).
    tm = max(8, min(tm, _round_up(M, 8)))
    Mp = _round_up(M, tm)

    # Stream narrow (bf16) operands; accumulate in f32 inside the kernel.
    patches_c = patches.astype(compute_dtype)
    weight_c = weight.astype(compute_dtype)
    bias_c = bias.astype(jnp.float32)
    if Mp != M:
        patches_c = jnp.pad(patches_c, ((0, Mp - M), (0, 0)))
    if Np != N:
        weight_c = jnp.pad(weight_c, ((0, 0), (0, Np - N)))
        bias_c = jnp.pad(bias_c, (0, Np - N))
    bias2d = bias_c.reshape(1, Np)

    grid = (Mp // tm,)
    bytes_accessed = (
        Mp * K * jnp.dtype(compute_dtype).itemsize          # patches
        + K * Np * jnp.dtype(compute_dtype).itemsize        # weight
        + Np * 4                                            # bias
        + Mp * Np * jnp.dtype(out_dtype).itemsize           # output
    )

    out = pl.pallas_call(
        _patch_embed_kernel,
        out_shape=jax.ShapeDtypeStruct((Mp, Np), out_dtype),
        grid_spec=pltpu.PrefetchScalarGridSpec(
            num_scalar_prefetch=0,
            grid=grid,
            in_specs=[
                pl.BlockSpec((tm, K), lambda i: (i, 0)),     # patch rows (streamed)
                pl.BlockSpec((K, Np), lambda i: (0, 0)),     # weight (resident)
                pl.BlockSpec((1, Np), lambda i: (0, 0)),     # bias (resident)
            ],
            out_specs=pl.BlockSpec((tm, Np), lambda i: (i, 0)),
        ),
        compiler_params=pltpu.CompilerParams(
            # Many grid steps + parallel => v7x's two TensorCores split M;
            # near-neutral (harmless) on v5e/v6e.
            dimension_semantics=("parallel",),
            vmem_limit_bytes=vmem_limit_bytes,
            # Let XLA fuse the patch-extraction transpose / bf16 casts into the
            # input DMAs instead of materializing `patches` in HBM.
            allow_input_fusion=[True, True, True],
        ),
        cost_estimate=pl.CostEstimate(
            flops=2 * Mp * K * Np,
            transcendentals=0,
            bytes_accessed=bytes_accessed,
        ),
    )(patches_c, weight_c, bias2d)

    if Mp != M or Np != N:
        out = out[:M, :N]
    return out


def patch_embedding_forward(x, weight, bias, patch_size, *, tm=1024,
                            out_dtype=None, compute_dtype=jnp.bfloat16):
    """
    x:      (B, C, H, W)            NCHW, like the PyTorch module input
    weight: (embed_dim, C, p, p)    Conv2d weight layout
    bias:   (embed_dim,)
    returns (B, Hp, Wp, embed_dim)  -- 'B H W C' (norm_layer=None -> Identity)
    """
    p = patch_size
    B, C, H, W = x.shape
    embed_dim = weight.shape[0]
    if out_dtype is None:
        out_dtype = x.dtype

    # padding() semantics: pad right/bottom so H, W divisible by patch_size.
    pad_h = (p - H % p) % p
    pad_w = (p - W % p) % p
    if pad_h or pad_w:
        x = jnp.pad(x, ((0, 0), (0, 0), (0, pad_h), (0, pad_w)))
    Hp = (H + pad_h) // p
    Wp = (W + pad_w) // p

    # Cast BEFORE the extraction: even if XLA does not fuse the transpose into
    # the kernel's input DMA, any materialized `patches` buffer is bf16.
    xc = x.astype(compute_dtype)
    xp = xc.reshape(B, C, Hp, p, Wp, p)
    xp = jnp.transpose(xp, (0, 2, 4, 1, 3, 5))          # (B, Hp, Wp, C, p, p)
    patches = xp.reshape(B * Hp * Wp, C * p * p)        # (M, K), (c, kh, kw) order

    # Conv weight (E, C, p, p) -> (K, E), matching the (c, kh, kw) flattening.
    w_mat = weight.reshape(embed_dim, C * p * p).T

    out = patch_embed_matmul(patches, w_mat, bias, tm=tm,
                             out_dtype=out_dtype, compute_dtype=compute_dtype)
    return out.reshape(B, Hp, Wp, embed_dim)            # 'B C H W -> B H W C'


def _reference(x, weight, bias, p):
    """Plain-JAX/XLA reference: pad + strided conv + bias + NHWC rearrange (f32)."""
    _, _, H, W = x.shape
    pad_h = (p - H % p) % p
    pad_w = (p - W % p) % p
    if pad_h or pad_w:
        x = jnp.pad(x, ((0, 0), (0, 0), (0, pad_h), (0, pad_w)))
    y = jax.lax.conv_general_dilated(
        x, weight, window_strides=(p, p), padding="VALID",
        dimension_numbers=("NCHW", "OIHW", "NCHW"))
    y = y + bias[None, :, None, None]
    return jnp.transpose(y, (0, 2, 3, 1))


if __name__ == "__main__":
    # Small shapes consistent with the module: B=2, in_c=4, H=W=16, patch=4, embed_dim=32
    B, C, H, W = 2, 4, 16, 16
    patch_size = 4
    embed_dim = 32

    key = jax.random.PRNGKey(0)
    kx, kw, kb = jax.random.split(key, 3)
    x = jax.random.normal(kx, (B, C, H, W), dtype=jnp.float32)
    weight = jax.random.normal(kw, (embed_dim, C, patch_size, patch_size),
                               dtype=jnp.float32) * 0.02
    bias = jax.random.normal(kb, (embed_dim,), dtype=jnp.float32) * 0.02

    # tm=8 on these toy shapes -> a 4-step grid, exercising the pipelined path.
    fwd = jax.jit(functools.partial(patch_embedding_forward,
                                    patch_size=patch_size, tm=8))
    out = jax.block_until_ready(fwd(x, weight, bias))
    ref = _reference(x, weight, bias, patch_size)
    assert out.shape == (B, H // patch_size, W // patch_size, embed_dim), out.shape
    # bf16-streamed inputs -> loosened tolerance vs. the f32 reference.
    assert jnp.allclose(out.astype(jnp.float32), ref, atol=2e-2, rtol=2e-2)

    # Second shape exercises the right/bottom spatial padding and the
    # M-not-multiple-of-tm padding path (M = 2*5*5 = 50, tm = 16).
    x2 = jax.random.normal(kx, (B, C, 18, 18), dtype=jnp.float32)
    out2 = jax.block_until_ready(
        patch_embedding_forward(x2, weight, bias, patch_size, tm=16))
    ref2 = _reference(x2, weight, bias, patch_size)
    assert out2.shape == (B, 5, 5, embed_dim), out2.shape
    assert jnp.allclose(out2.astype(jnp.float32), ref2, atol=2e-2, rtol=2e-2)

    print("KERNEL_OK")
</pallas_src>

<mosaic_0001>
module attributes {stable_mosaic.version = 11 : i64} {
  func.func @_patch_embed_kernel(%arg0: i32, %arg1: memref<8x64xbf16, #tpu.memory_space<vmem>>, %arg2: memref<64x128xbf16, #tpu.memory_space<vmem>>, %arg3: memref<1x128xf32, #tpu.memory_space<vmem>>, %arg4: memref<8x128xf32, #tpu.memory_space<vmem>>) attributes {dimension_semantics = [#tpu.dimension_semantics<parallel>], iteration_bounds = array<i64: 4>, scalar_prefetch = 0 : i64, scratch_operands = 0 : i64, tpu.core_type = #tpu.core_type<tc>, window_params = [{transform_indices = @transform_0, window_bounds = array<i64: 8, 64>}, {pipeline_mode = #tpu.pipeline_mode<synchronous>, transform_indices = @transform_1, window_bounds = array<i64: 64, 128>}, {pipeline_mode = #tpu.pipeline_mode<synchronous>, transform_indices = @transform_2, window_bounds = array<i64: 1, 128>}, {transform_indices = @transform_3, window_bounds = array<i64: 8, 128>}]} {
    %c0 = arith.constant 0 : index
    %c0_0 = arith.constant 0 : index
    %0 = vector.load %arg1[%c0, %c0_0] : memref<8x64xbf16, #tpu.memory_space<vmem>>, vector<8x64xbf16>
    %c0_1 = arith.constant 0 : index
    %c0_2 = arith.constant 0 : index
    %1 = vector.load %arg2[%c0_1, %c0_2] : memref<64x128xbf16, #tpu.memory_space<vmem>>, vector<64x128xbf16>
    %cst = arith.constant dense<0.000000e+00> : vector<8x128xf32>
    %2 = tpu.matmul %0, %1, %cst {dimension_numbers = #tpu.dot_dimension_numbers<[1], [0], [0], [1], [0, 0, 1, 1], [], []>} : vector<8x64xbf16>, vector<64x128xbf16>, vector<8x128xf32> -> vector<8x128xf32>
    %c0_3 = arith.constant 0 : index
    %c0_4 = arith.constant 0 : index
    %3 = vector.load %arg3[%c0_3, %c0_4] : memref<1x128xf32, #tpu.memory_space<vmem>>, vector<1x128xf32>
    %4 = vector.broadcast %3 : vector<1x128xf32> to vector<8x128xf32>
    %5 = arith.addf %2, %4 : vector<8x128xf32>
    %c0_5 = arith.constant 0 : index
    %c0_6 = arith.constant 0 : index
    %6 = vector.load %arg4[%c0_5, %c0_6] : memref<8x128xf32, #tpu.memory_space<vmem>>, vector<8x128xf32>
    tpu.vector_store %arg4[%c0_5, %c0_6], %5 {strides = array<i32>} : memref<8x128xf32, #tpu.memory_space<vmem>>, vector<8x128xf32>,
    return
  }
  func.func @transform_0(%arg0: i32) -> (i32, i32) {
    %c0_i32 = arith.constant 0 : i32
    %c0_i32_0 = arith.constant 0 : i32
    return %arg0, %c0_i32 : i32, i32
  }
  func.func @transform_1(%arg0: i32) -> (i32, i32) {
    %c0_i32 = arith.constant 0 : i32
    %c0_i32_0 = arith.constant 0 : i32
    %c0_i32_1 = arith.constant 0 : i32
    return %c0_i32, %c0_i32_0 : i32, i32
  }
  func.func @transform_2(%arg0: i32) -> (i32, i32) {
    %c0_i32 = arith.constant 0 : i32
    %c0_i32_0 = arith.constant 0 : i32
    %c0_i32_1 = arith.constant 0 : i32
    return %c0_i32, %c0_i32_0 : i32, i32
  }
  func.func @transform_3(%arg0: i32) -> (i32, i32) {
    %c0_i32 = arith.constant 0 : i32
    %c0_i32_0 = arith.constant 0 : i32
    return %arg0, %c0_i32 : i32, i32
  }
}

</mosaic_0001>

<llo_original>
// kernel: patch_embedding_forward.2
$region0: #{patch_embedding_forward.2}
  #allocation0 [shape = 'u32[]', space=smem, size = 0x4, offset = 0x4, fixed_abs, tag = 'smem constant byte address 0x4 - core index']
  #allocation1 [shape = 'u32[144,128]{1,0:T(1,128)}', space=vmem, size = 0x12000, scoped, tag = 'internal scratch']
  #allocation2 [shape = 'u32[2048]{0}', space=vmem, size = 0x2000, scoped, tag = 'scoped memory for patch_embedding_forward.2']
  #allocation3 [shape = 'u32[2048]{0}', space=vmem, size = 0x2000, scoped, tag = 'scoped memory for patch_embedding_forward.2']
  #allocation4 [shape = 'u32[2048]{0}', space=vmem, size = 0x2000, scoped, tag = 'scoped memory for patch_embedding_forward.2']
  #allocation5 [shape = 'u32[2048]{0}', space=vmem, size = 0x2000, scoped, tag = 'scoped memory for patch_embedding_forward.2']
  #allocation6 [shape = 'u32[2048]{0}', space=vmem, size = 0x2000, scoped, tag = 'scoped memory for patch_embedding_forward.2']
  #allocation7 [shape = 'u32[2048]{0}', space=vmem, size = 0x2000, scoped, tag = 'scoped memory for patch_embedding_forward.2']
  #allocation8 [shape = 'u32[2048]{0}', space=vmem, size = 0x2000, scoped, tag = 'scoped memory for patch_embedding_forward.2']
  #allocation9 [shape = 'u32[2048]{0}', space=vmem, size = 0x2000, scoped, tag = 'scoped memory for patch_embedding_forward.2']
  #allocation10 [shape = 'u32[2048]{0}', space=vmem, size = 0x2000, scoped, tag = 'scoped memory for patch_embedding_forward.2']
  #allocation11 [shape = 'u32[2048]{0}', space=vmem, size = 0x2000, scoped, tag = 'scoped memory for patch_embedding_forward.2']
  %s0 = inlined_call_operand.vmem [shape: bf16[32,64], index: 0, kind: input, shape index: {}]
  %s1 = inlined_call_operand.vmem [shape: bf16[64,32], index: 1, kind: input, shape index: {}]
  %s2 = inlined_call_operand.<no memory space> [shape: bf16[], index: 2, kind: input, shape index: {}]
  %s3 = inlined_call_operand.vmem [shape: f32[32], index: 3, kind: input, shape index: {}]
  %s4 = inlined_call_operand.<no memory space> [shape: f32[], index: 4, kind: input, shape index: {}]
  %s5 = inlined_call_operand.hbm [shape: f32[32,128], index: 5, kind: output, shape index: {}]
  %s6 = sld [smem:[#allocation0]]
  $region45: #{patch_embedding_forward.2} parent=0
    _
  %s8 = ssub.s32 1, %s6
  %s9 = scalar_select 0, %s8, %s6
  %v10 = vstv %s2
  %v11 = vunpack.i.l.bf16 %v10
  %v13 = vunpack.i.h.bf16 %v10
  %v15 = vstv %s4
  $region1: #{patch_embedding_forward.2} parent=0
    #allocation12 [shape = 'u8[8192]{0}', space=vmem, size = 0x2000, scoped, tag = 'output window, operand 0']
    #allocation13 [shape = 's32[2]{0}', space=sflag, size = 0x8, scoped, tag = 'scoped memory for patch_embedding_forward.2']
    %16 = vsyncpa [#allocation13], 0
    %s17 = scalar_lea.sflag [#allocation13], 1
    %18 = vsyncpa %s17, 0
    loop: start=0, step=1, limit=6
    $region2: #{patch_embedding_forward.2} parent=1 // loop_pre_header
      _
    $region3: #{patch_embedding_forward.2} parent=1 // loop_header
      %s20 = sphi 0, %s24
      %p21 = scmp.ge.s32.totalorder %s20, 6
      %s30 = sphi 0, %s32
      %s33 = sphi 0, %s30
      %s34 = sphi 0, %s33
      %s50 = sphi 0, %s34
      %s54 = sphi 0, %s54
      %s56 = sphi 0, %s54
      %s57 = sphi 0, %s56
      %s71 = sphi 0, %s57
      %s75 = sphi 0, %s75
      %s77 = sphi 0, %s75
      %s78 = sphi 0, %s77
      %s92 = sphi 0, %s78
      %s98 = sphi 0, %s100
      %s101 = sphi 0, %s98
      %s102 = sphi 0, %s101
      %s118 = sphi 0, %s102
    $region4: #{patch_embedding_forward.2} parent=1 // loop_header_branch
      %23 = sbr.rel (%p21) target = $region8
    $region5: #{patch_embedding_forward.2} parent=1 // loop_body
      %s25 = ssub.s32 %s20, 1
      %s26 = ssub.s32 %s20, 2
      %s27 = sadd.s32 %s20, 1
      %s28 = ssub.s32 %s20, %s27
      %p29 = scmp.eq.s32.totalorder %s28, 0
      %s31 = sadd.s32 %s30, 1
      %s32 = scalar_select %p29, %s30, %s31
      %p35 = pneg %p29
      %p36 = scmp.eq.s32.totalorder %s20, 3
      %p37 = por %p35, %p36
      %p38 = scmp.ne.s32.totalorder %s30, %s33
      %p39 = scmp.eq.s32.totalorder %s20, 0
      %p40 = por %p38, %p39
      %p41 = scmp.ne.s32.totalorder %s30, %s33
      %p42 = scmp.eq.s32.totalorder %s25, 3
      %p43 = por %p41, %p42
      %p44 = scmp.ne.s32.totalorder %s33, %s34
      %p45 = scmp.eq.s32.totalorder %s25, 0
      %p46 = por %p44, %p45
      %p47 = scmp.ne.s32.totalorder %s33, %s34
      %p48 = scmp.eq.s32.totalorder %s26, 3
      %p49 = por %p47, %p48
      %p51 = scmp.ne.s32.totalorder %s34, %s50
      %p52 = scmp.eq.s32.totalorder %s26, 0
      %p53 = por %p51, %p52
      %s55 = sadd.s32 %s54, 1
      %p58 = scmp.eq.s32.totalorder %s20, 3
      %p59 = scmp.ne.s32.totalorder %s54, %s56
      %p60 = scmp.eq.s32.totalorder %s20, 0
      %p61 = por %p59, %p60
      %p62 = scmp.ne.s32.totalorder %s54, %s56
      %p63 = scmp.eq.s32.totalorder %s25, 3
      %p64 = por %p62, %p63
      %p65 = scmp.ne.s32.totalorder %s56, %s57
      %p66 = scmp.eq.s32.totalorder %s25, 0
      %p67 = por %p65, %p66
      %p68 = scmp.ne.s32.totalorder %s56, %s57
      %p69 = scmp.eq.s32.totalorder %s26, 3
      %p70 = por %p68, %p69
      %p72 = scmp.ne.s32.totalorder %s57, %s71
      %p73 = scmp.eq.s32.totalorder %s26, 0
      %p74 = por %p72, %p73
      %s76 = sadd.s32 %s75, 1
      %p79 = scmp.eq.s32.totalorder %s20, 3
      %p80 = scmp.ne.s32.totalorder %s75, %s77
      %p81 = scmp.eq.s32.totalorder %s20, 0
      %p82 = por %p80, %p81
      %p83 = scmp.ne.s32.totalorder %s75, %s77
      %p84 = scmp.eq.s32.totalorder %s25, 3
      %p85 = por %p83, %p84
      %p86 = scmp.ne.s32.totalorder %s77, %s78
      %p87 = scmp.eq.s32.totalorder %s25, 0
      %p88 = por %p86, %p87
      %p89 = scmp.ne.s32.totalorder %s77, %s78
      %p90 = scmp.eq.s32.totalorder %s26, 3
      %p91 = por %p89, %p90
      %p93 = scmp.ne.s32.totalorder %s78, %s92
      %p94 = scmp.eq.s32.totalorder %s26, 0
      %p95 = por %p93, %p94
      %s96 = ssub.s32 %s20, %s27
      %p97 = scmp.eq.s32.totalorder %s96, 0
      %s99 = sadd.s32 %s98, 1
      %s100 = scalar_select %p97, %s98, %s99
      %p103 = pneg %p97
      %p104 = scmp.eq.s32.totalorder %s20, 3
      %p105 = por %p103, %p104
      %p106 = scmp.ne.s32.totalorder %s98, %s101
      %p107 = scmp.eq.s32.totalorder %s20, 0
      %p108 = por %p106, %p107
      %p109 = scmp.ne.s32.totalorder %s98, %s101
      %p110 = scmp.eq.s32.totalorder %s25, 3
      %p111 = por %p109, %p110
      %p112 = scmp.ne.s32.totalorder %s101, %s102
      %p113 = scmp.eq.s32.totalorder %s25, 0
      %p114 = por %p112, %p113
      %p115 = scmp.ne.s32.totalorder %s101, %s102
      %p116 = scmp.eq.s32.totalorder %s26, 3
      %p117 = por %p115, %p116
      %p119 = scmp.ne.s32.totalorder %s102, %s118
      %p120 = scmp.eq.s32.totalorder %s26, 0
      %p121 = por %p119, %p120
      %p122 = scmp.le.s32.totalorder 1, %s20
      %p123 = scmp.lt.s32.totalorder %s20, 5
      %p124 = pnand %p122, %p123
      %p125 = pneg %p124
      // Predicated region
      $region9: #{patch_embedding_forward.2} parent=5 // pred_check
        _
      $region10: #{patch_embedding_forward.2} parent=5 // pred_check_branch
        %127 = sbr.rel (%p124) target = $region12
      $region11: #{patch_embedding_forward.2} parent=5 // pred_region
        %s128 = ssub.s32 %s20, 1
        // Predicated region
        $region13: #{patch_embedding_forward.2} parent=11 // pred_check
          %p129 = pneg %p67
        $region14: #{patch_embedding_forward.2} parent=11 // pred_check_branch
          %131 = sbr.rel (%p129) target = $region16
        $region15: #{patch_embedding_forward.2} parent=11 // pred_region
          _
        $region16: #{patch_embedding_forward.2} parent=11 // pred_fallthru
          _
        // Predicated region
        $region17: #{patch_embedding_forward.2} parent=11 // pred_check
          %p132 = pneg %p88
        $region18: #{patch_embedding_forward.2} parent=11 // pred_check_branch
          %134 = sbr.rel (%p132) target = $region20
        $region19: #{patch_embedding_forward.2} parent=11 // pred_region
          _
        $region20: #{patch_embedding_forward.2} parent=11 // pred_fallthru
          _
      $region12: #{patch_embedding_forward.2} parent=5 // pred_fallthru
        _
      %p135 = scmp.lt.s32.totalorder %s20, 4
      // Predicated region
      $region21: #{patch_embedding_forward.2} parent=5 // pred_check
        %p136 = pneg %p135
      $region22: #{patch_embedding_forward.2} parent=5 // pred_check_branch
        %138 = sbr.rel (%p136) target = $region24
      $region23: #{patch_embedding_forward.2} parent=5 // pred_region
        // Predicated region
        $region25: #{patch_embedding_forward.2} parent=23 // pred_check
          %p139 = pneg %p40
        $region26: #{patch_embedding_forward.2} parent=23 // pred_check_branch
          %141 = sbr.rel (%p139) target = $region28
        $region27: #{patch_embedding_forward.2} parent=23 // pred_region
          %p142 = scmp.lt.s32.totalorder %s20, 3
          %s143 = scalar_select %p142, %s20, 3
          %s144 = smul.addr %s143, 4
          %s145 = scalar_lea.vmem %s0, %s144
        $region28: #{patch_embedding_forward.2} parent=23 // pred_fallthru
          _
      $region24: #{patch_embedding_forward.2} parent=5 // pred_fallthru
        _
      %p146 = scmp.le.s32.totalorder 1, %s20
      %p147 = scmp.lt.s32.totalorder %s20, 5
      %p148 = pnand %p146, %p147
      %p149 = pneg %p148
      // Predicated region
      $region29: #{patch_embedding_forward.2} parent=5 // pred_check
        _
      $region30: #{patch_embedding_forward.2} parent=5 // pred_check_branch
        %151 = sbr.rel (%p148) target = $region32
      $region31: #{patch_embedding_forward.2} parent=5 // pred_region
        #allocation14 [shape = 'u8[16384]{0}', space=vmem, size = 0x4000, dematerialized = true, scoped, tag = 'FusionAdapter Buffer %fusion.1 = bf16[64,128]{1,0:T(8,128)(2,1)} fusion(%param_1.3, %param_2.2), kind=kLoop, calls=%fused_computation.2.clone, metadata={op_name="jit(patch_embedding_forward)/jit(_pad)/pad" stack_frame_id=15}']
        #allocation15 [shape = 'u8[512]{0}', space=vmem, size = 0x400, dematerialized = true, scoped, tag = 'FusionAdapter Buffer %fusion.2 = f32[1,128]{1,0:T(1,128)} fusion(%param_3.2, %param_4), kind=kLoop, calls=%fused_computation.3.clone, metadata={op_name="jit(patch_embedding_forward)/reshape" stack_frame_id=17}']
        %s152 = ssub.s32 %s20, 1
        %p153 = scmp.lt.s32.totalorder %s25, 3
        %s154 = scalar_select %p153, %s25, 3
        %s155 = smul.addr %s154, 4
        %s156 = scalar_lea.vmem %s0, %s155
        %p157 = pneg %p46
        %p158 = pneg %p43
        %p159 = pneg %p67
        %p160 = pneg %p64
        %p161 = pneg %p88
        %p162 = pneg %p85
        %p163 = pneg %p114
        %p164 = pneg %p111
        %s165 = sand.u32 %s101, 1
        %s166 = scalar_lea.sflag [#allocation13], %s165
        %s167 = sand.u32 %s101, 1
        %s168 = smul.addr %s167, 8
        %s169 = scalar_lea.vmem [#allocation12], %s168
        %p170 = scmp.lt.s32.totalorder %s25, 3
        %s171 = scalar_select %p170, %s25, 3
        %s172 = smul.addr %s171, 4
        %s173 = scalar_lea.vmem %s0, %s172
        %s175 = sor.u32 255, 127
        %s176 = sand.u32 %s175, 85
        %s177 = sshrl.u32 %s176, 1
        %s178 = sor.u32 %s176, %s177
        %s179 = sand.u32 51, %s178
        %s180 = sshrl.u32 %s179, 2
        %s181 = sor.u32 %s179, %s180
        %s182 = sand.u32 15, %s181
        %v183 = vld [vmem:[%s1] sm:%s182]
        %v184 = vunpack.c.l.bf16 %v183
        %v185 = vunpack.c.h.bf16 %v183
        %v186 = vlaneseq
        %v187 = vand.u32 %v186, 127
        %vm189 = vcmp.lt.s32.totalorder %v187, 32
        %v190 = vsel %vm189, %v184, %v11
        %v191 = vpack.c.bf16 0.0, %v190
        %193 = vst [vmem:[#allocation14] sm:$0xf] %v191
        %s194 = scalar_lea.vmem %s1, 4
        %s196 = sor.u32 255, 127
        %s197 = sand.u32 %s196, 85
        %s198 = sshrl.u32 %s197, 1
        %s199 = sor.u32 %s197, %s198
        %s200 = sand.u32 51, %s199
        %s201 = sshrl.u32 %s200, 2
        %s202 = sor.u32 %s200, %s201
        %s203 = sand.u32 15, %s202
        %v204 = vld [vmem:[%s194] sm:%s203]
        %v205 = vunpack.c.l.bf16 %v204
        %v206 = vunpack.c.h.bf16 %v204
        %v207 = vlaneseq
        %v208 = vand.u32 %v207, 127
        %vm210 = vcmp.lt.s32.totalorder %v208, 32
        %v211 = vsel %vm210, %v205, %v11
        %s212 = scalar_lea.vmem [#allocation14], 4
        %v213 = vpack.c.bf16 0.0, %v211
        %215 = vst [vmem:[%s212] sm:$0xf] %v213
        %s216 = scalar_lea.vmem %s1, 8
        %s218 = sor.u32 255, 127
        %s219 = sand.u32 %s218, 85
        %s220 = sshrl.u32 %s219, 1
        %s221 = sor.u32 %s219, %s220
        %s222 = sand.u32 51, %s221
        %s223 = sshrl.u32 %s222, 2
        %s224 = sor.u32 %s222, %s223
        %s225 = sand.u32 15, %s224
        %v226 = vld [vmem:[%s216] sm:%s225]
        %v227 = vunpack.c.l.bf16 %v226
        %v228 = vunpack.c.h.bf16 %v226
        %v229 = vlaneseq
        %v230 = vand.u32 %v229, 127
        %vm232 = vcmp.lt.s32.totalorder %v230, 32
        %v233 = vsel %vm232, %v227, %v11
        %s234 = scalar_lea.vmem [#allocation14], 8
        %v235 = vpack.c.bf16 0.0, %v233
        %237 = vst [vmem:[%s234] sm:$0xf] %v235
        %s238 = scalar_lea.vmem %s1, 12
        %s240 = sor.u32 255, 127
        %s241 = sand.u32 %s240, 85
        %s242 = sshrl.u32 %s241, 1
        %s243 = sor.u32 %s241, %s242
        %s244 = sand.u32 51, %s243
        %s245 = sshrl.u32 %s244, 2
        %s246 = sor.u32 %s244, %s245
        %s247 = sand.u32 15, %s246
        %v248 = vld [vmem:[%s238] sm:%s247]
        %v249 = vunpack.c.l.bf16 %v248
        %v250 = vunpack.c.h.bf16 %v248
        %v251 = vlaneseq
        %v252 = vand.u32 %v251, 127
        %vm254 = vcmp.lt.s32.totalorder %v252, 32
        %v255 = vsel %vm254, %v249, %v11
        %s256 = scalar_lea.vmem [#allocation14], 12
        %v257 = vpack.c.bf16 0.0, %v255
        %259 = vst [vmem:[%s256] sm:$0xf] %v257
        %s260 = scalar_lea.vmem %s1, 16
        %s262 = sor.u32 255, 127
        %s263 = sand.u32 %s262, 85
        %s264 = sshrl.u32 %s263, 1
        %s265 = sor.u32 %s263, %s264
        %s266 = sand.u32 51, %s265
        %s267 = sshrl.u32 %s266, 2
        %s268 = sor.u32 %s266, %s267
        %s269 = sand.u32 15, %s268
        %v270 = vld [vmem:[%s260] sm:%s269]
        %v271 = vunpack.c.l.bf16 %v270
        %v272 = vunpack.c.h.bf16 %v270
        %v273 = vlaneseq
        %v274 = vand.u32 %v273, 127
        %vm276 = vcmp.lt.s32.totalorder %v274, 32
        %v277 = vsel %vm276, %v271, %v11
        %s278 = scalar_lea.vmem [#allocation14], 16
        %v279 = vpack.c.bf16 0.0, %v277
        %281 = vst [vmem:[%s278] sm:$0xf] %v279
        %s282 = scalar_lea.vmem %s1, 20
        %s284 = sor.u32 255, 127
        %s285 = sand.u32 %s284, 85
        %s286 = sshrl.u32 %s285, 1
        %s287 = sor.u32 %s285, %s286
        %s288 = sand.u32 51, %s287
        %s289 = sshrl.u32 %s288, 2
        %s290 = sor.u32 %s288, %s289
        %s291 = sand.u32 15, %s290
        %v292 = vld [vmem:[%s282] sm:%s291]
        %v293 = vunpack.c.l.bf16 %v292
        %v294 = vunpack.c.h.bf16 %v292
        %v295 = vlaneseq
        %v296 = vand.u32 %v295, 127
        %vm298 = vcmp.lt.s32.totalorder %v296, 32
        %v299 = vsel %vm298, %v293, %v11
        %s300 = scalar_lea.vmem [#allocation14], 20
        %v301 = vpack.c.bf16 0.0, %v299
        %303 = vst [vmem:[%s300] sm:$0xf] %v301
        %s304 = scalar_lea.vmem %s1, 24
        %s306 = sor.u32 255, 127
        %s307 = sand.u32 %s306, 85
        %s308 = sshrl.u32 %s307, 1
        %s309 = sor.u32 %s307, %s308
        %s310 = sand.u32 51, %s309
        %s311 = sshrl.u32 %s310, 2
        %s312 = sor.u32 %s310, %s311
        %s313 = sand.u32 15, %s312
        %v314 = vld [vmem:[%s304] sm:%s313]
        %v315 = vunpack.c.l.bf16 %v314
        %v316 = vunpack.c.h.bf16 %v314
        %v317 = vlaneseq
        %v318 = vand.u32 %v317, 127
        %vm320 = vcmp.lt.s32.totalorder %v318, 32
        %v321 = vsel %vm320, %v315, %v11
        %s322 = scalar_lea.vmem [#allocation14], 24
        %v323 = vpack.c.bf16 0.0, %v321
        %325 = vst [vmem:[%s322] sm:$0xf] %v323
        %s326 = scalar_lea.vmem %s1, 28
        %s328 = sor.u32 255, 127
        %s329 = sand.u32 %s328, 85
        %s330 = sshrl.u32 %s329, 1
        %s331 = sor.u32 %s329, %s330
        %s332 = sand.u32 51, %s331
        %s333 = sshrl.u32 %s332, 2
        %s334 = sor.u32 %s332, %s333
        %s335 = sand.u32 15, %s334
        %v336 = vld [vmem:[%s326] sm:%s335]
        %v337 = vunpack.c.l.bf16 %v336
        %v338 = vunpack.c.h.bf16 %v336
        %v339 = vlaneseq
        %v340 = vand.u32 %v339, 127
        %vm342 = vcmp.lt.s32.totalorder %v340, 32
        %v343 = vsel %vm342, %v337, %v11
        %s344 = scalar_lea.vmem [#allocation14], 28
        %v345 = vpack.c.bf16 0.0, %v343
        %347 = vst [vmem:[%s344] sm:$0xf] %v345
        %v348 = vld [vmem:[%s3] sm:$0x1]
        %v349 = vlaneseq
        %vm351 = vcmp.lt.s32.totalorder %v349, 32
        %v352 = vsel %vm351, %v348, %v15
        %354 = vst [vmem:[#allocation15] sm:$0x1] %v352
        %v356 = vld [vmem:[%s173] sm:$0xf]
        %v357 = vld [vmem:[#allocation14] sm:$0xf]
        %v358 = vld [vmem:[#allocation14 + $0x4] sm:$0xf]
        %v359 = vld [vmem:[#allocation14 + $0x8] sm:$0xf]
        %v360 = vld [vmem:[#allocation14 + $0xc] sm:$0xf]
        %v361 = vld [vmem:[#allocation14 + $0x10] sm:$0xf]
        %v362 = vld [vmem:[#allocation14 + $0x14] sm:$0xf]
        %v363 = vld [vmem:[#allocation14 + $0x18] sm:$0xf]
        %v364 = vld [vmem:[#allocation14 + $0x1c] sm:$0xf]
        %v365 = vld [vmem:[#allocation15] sm:$0x1]
        %v367 = vlaneseq
        %v368 = vshrl.u32 %v367, 7
        %v369 = vsub.s32 0, %v368
        %v370 = vrot.slane %v365, %v369
        %v380 = vunpack.c.l.b16 %v357
        %v381 = vunpack.c.l.b16 %v358
        %v382 = vunpack.c.l.b16 %v359
        %v383 = vunpack.c.l.b16 %v360
        %v384 = vunpack.c.l.b16 %v361
        %v385 = vunpack.c.l.b16 %v362
        %v386 = vunpack.c.l.b16 %v363
        %v387 = vunpack.c.l.b16 %v364
        %v388 = vpack.c.b16 %v381, %v380
        %v389 = vpack.c.b16 %v383, %v382
        %v390 = vpack.c.b16 %v385, %v384
        %v391 = vpack.c.b16 %v387, %v386
        %vm396 = vcmask 523264
        %v398 = vsel %vm396, %v356, 0
        %400 = vmatprep.subr.bf16.mxu0 0
        %401 = vmatpush1.bf16.msra.mxu0 %v388
        %402 = vmatprep.subr.bf16.mxu0 0
        %403 = vmatpush1.bf16.msra.mxu0 %v389
        %404 = vmatprep.subr.bf16.mxu0 0
        %405 = vmatpush1.bf16.msra.mxu0 %v390
        %406 = vmatprep.subr.bf16.mxu0 0
        %407 = vmatpush1.bf16.msra.mxu0 %v391
        %408 = vmatprep.subr.bf16.mxu0 0
        %409 = vmatpush1.bf16.msra.mxu0 0
        %410 = vmatprep.subr.bf16.mxu0 0
        %411 = vmatpush1.bf16.msra.mxu0 0
        %412 = vmatprep.subr.bf16.mxu0 0
        %413 = vmatpush1.bf16.msra.mxu0 0
        %414 = vmatprep.subr.bf16.mxu0 0
        %415 = vmatpush1.bf16.msra.mxu0 0
        %416 = vmatprep.subr.bf16.mxu0 0
        %417 = vmatpush1.bf16.msra.mxu0 0
        %418 = vmatprep.subr.bf16.mxu0 0
        %419 = vmatpush1.bf16.msra.mxu0 0
        %420 = vmatprep.subr.bf16.mxu0 0
        %421 = vmatpush1.bf16.msra.mxu0 0
        %422 = vmatprep.subr.bf16.mxu0 0
        %423 = vmatpush1.bf16.msra.mxu0 0
        %424 = vmatprep.subr.bf16.mxu0 0
        %425 = vmatpush1.bf16.msra.mxu0 0
        %426 = vmatprep.subr.bf16.mxu0 0
        %427 = vmatpush1.bf16.msra.mxu0 0
        %428 = vmatprep.subr.bf16.mxu0 0
        %429 = vmatpush1.bf16.msra.mxu0 0
        %430 = vmatprep.subr.bf16.mxu0 0
        %431 = vmatpush1.bf16.msra.mxu0 0
        %432 = vmatprep.mubr.bf16.mxu0 0
        %433 = vmatmul.mubr.bf16.gmra.mrb[0].mxu0 %v398
        %v434 = vpop.f32.mrb[0].mxu0
        %v435 = vadd.f32 %v370, %v434
        %v436 = vpop.f32.mrb[0].mxu0
        %v437 = vpop.f32.mrb[0].mxu0
        %v438 = vpop.f32.mrb[0].mxu0
        %439 = vdwg.mxu0
        %440 = vst [vmem:[%s169] sm:$0xff] %v435
        %s441 = sand.u32 %s101, 1
        %s442 = scalar_lea.sflag [#allocation13], %s441
        %s443 = sand.u32 %s101, 1
        %s444 = smul.addr %s443, 8
        %s445 = scalar_lea.vmem [#allocation12], %s444
        // Predicated region
        $region33: #{patch_embedding_forward.2} parent=31 // pred_check
          %p446 = pneg %p111
        $region34: #{patch_embedding_forward.2} parent=31 // pred_check_branch
          %448 = sbr.rel (%p446) target = $region36
        $region35: #{patch_embedding_forward.2} parent=31 // pred_region
          %s450 = ssub.s32 128, 128
          %451 = vsyncadd %s442, %s450
          %s452 = smul.addr %s25, 128
          %s453 = scalar_lea.hbm %s5, %s452
          %s455 = sshll.u32 %s445, 4
          %s456 = int_to_ptr.vmem [resolvable:$true] %s455
          %458 = dma.vmem_to_hbm [thread:$0]  %s456, 128, %s453, %s442
        $region36: #{patch_embedding_forward.2} parent=31 // pred_fallthru
          _
      $region32: #{patch_embedding_forward.2} parent=5 // pred_fallthru
        _
      %p459 = scmp.le.s32.totalorder 2, %s20
      // Predicated region
      $region37: #{patch_embedding_forward.2} parent=5 // pred_check
        %p460 = pneg %p459
      $region38: #{patch_embedding_forward.2} parent=5 // pred_check_branch
        %462 = sbr.rel (%p460) target = $region40
      $region39: #{patch_embedding_forward.2} parent=5 // pred_region
        %s463 = ssub.s32 %s20, 2
        // Predicated region
        $region41: #{patch_embedding_forward.2} parent=39 // pred_check
          %p464 = pneg %p117
        $region42: #{patch_embedding_forward.2} parent=39 // pred_check_branch
          %466 = sbr.rel (%p464) target = $region44
        $region43: #{patch_embedding_forward.2} parent=39 // pred_region
          %s467 = sand.u32 %s102, 1
          %s468 = scalar_lea.sflag [#allocation13], %s467
          %s469 = sand.u32 %s102, 1
          %s470 = smul.addr %s469, 8
          %s471 = scalar_lea.vmem [#allocation12], %s470
          %472 = dma.done %s468, 128
        $region44: #{patch_embedding_forward.2} parent=39 // pred_fallthru
          _
      $region40: #{patch_embedding_forward.2} parent=5 // pred_fallthru
        _
    $region6: #{patch_embedding_forward.2} parent=1 // loop_footer
      %s24 = sadd.s32 1, %s20
    $region7: #{patch_embedding_forward.2} parent=1 // loop_footer_branch
      %19 = sbr.rel target = $region3
    $region8: #{patch_embedding_forward.2} parent=1 // loop_exit
      _
    %473 = vsyncpa [#allocation13], 1
    %s474 = scalar_lea.sflag [#allocation13], 1
    %475 = vsyncpa %s474, 1

</llo_original>
